<compile_context>
chip_gen: v5e
topology: v5e:2x2
jax: 0.10.0
libtpu: 0.0.40
codegen_flags: <defaults>
</compile_context>

<pallas_src>
import jax
import jax.numpy as jnp
from jax import lax
from jax.experimental import pallas as pl
from jax.experimental.pallas import tpu as pltpu

EMBEDDING_SIZE = 50   # matches `embedding_size = 50` in the PyTorch script
BERT_DIM = 64         # bert_embeddings.shape[1] (small synthetic value)
LANE = 128            # TPU lane width


def _round_up(x, m):
    return (x + m - 1) // m * m


def _vmem_capacity_bytes():
    try:
        info = pltpu.get_tpu_info()
        return int(getattr(info, "vmem_capacity_bytes", 64 * 1024 * 1024))
    except Exception:
        return 64 * 1024 * 1024   # conservative default (v7x per-TC VMEM)


# --------------------------------------------------------------------------
# Fast path: tables fully resident in VMEM, gather with dynamic vector loads.
# --------------------------------------------------------------------------
def _score_kernel_vmem(users_ref, items_ref,      # scalar-prefetch indices (SMEM)
                       user_tbl, bert_tbl,        # whole tables, VMEM-resident
                       w_ref, b_ref,              # VMEM-resident weight / bias
                       out_ref,                   # (1, TB) lane-dense scores
                       ubuf, bbuf):               # (TB, E) / (TB, D) gather scratch
    tb = ubuf.shape[0]
    base = pl.program_id(0) * tb

    # Fused embedding gather: dynamic row loads from the VMEM-resident tables
    # (no DMA descriptors, no semaphores).
    @pl.loop(0, tb)
    def _gather(r):
        u = users_ref[base + r]
        it = items_ref[base + r]
        ubuf[pl.ds(r, 1), :] = user_tbl[pl.ds(u, 1), :]
        bbuf[pl.ds(r, 1), :] = bert_tbl[pl.ds(it, 1), :]

    # news = sigmoid(bert @ W + b): (TB, D) x (D, E) on the MXU, f32 accumulate.
    news = jnp.dot(bbuf[...], w_ref[...], preferred_element_type=jnp.float32)
    news = jax.nn.sigmoid(news + b_ref[...])

    # score = sigmoid(sum(user * news, axis=1)); lane-dense (1, TB) store.
    row_dot = jnp.sum(ubuf[...] * news, axis=1)
    out_ref[...] = jnp.reshape(jax.nn.sigmoid(row_dot), (1, tb))


# --------------------------------------------------------------------------
# Fallback path: tables stay in HBM; chunked row-DMA gather, double-buffered
# across grid steps, one aggregated wait per table per chunk.
# --------------------------------------------------------------------------
def _score_kernel_hbm(users_ref, items_ref,       # scalar-prefetch indices (SMEM)
                      user_tbl, bert_tbl,         # HBM tables (memory_space=pl.ANY)
                      w_ref, b_ref,               # VMEM-resident weight / bias
                      out_ref,                    # (1, C) lane-dense scores
                      ubuf, bbuf, usem, bsem):    # 2-slot row buffers + DMA sems
    c = out_ref.shape[1]                          # rows handled per grid step
    i = pl.program_id(0)
    n = pl.num_programs(0)
    slot = lax.rem(i, 2)

    def start_rows(step, slot_):
        # One row-DMA per batch element of chunk `step`, landing in slot `slot_`.
        base = step * c
        row0 = slot_ * c

        @pl.loop(0, c)
        def _(r):
            u = users_ref[base + r]
            it = items_ref[base + r]
            pltpu.make_async_copy(user_tbl.at[pl.ds(u, 1)],
                                  ubuf.at[pl.ds(row0 + r, 1)],
                                  usem.at[slot_]).start()
            pltpu.make_async_copy(bert_tbl.at[pl.ds(it, 1)],
                                  bbuf.at[pl.ds(row0 + r, 1)],
                                  bsem.at[slot_]).start()

    @pl.when(i == 0)
    def _prime():
        start_rows(0, 0)

    # Prefetch the NEXT chunk's rows into the other slot *before* waiting on the
    # current one, so its DMAs overlap with this chunk's matmul/reduce/store.
    @pl.when(i + 1 < n)
    def _prefetch():
        start_rows(i + 1, 1 - slot)

    # ONE aggregated wait per table per chunk: DMA-semaphore waits count bytes,
    # and this (C, E) descriptor's byte count equals the sum of the C single-row
    # copies started on the same semaphore slot.  (src == dst in-bounds VMEM view;
    # only the destination size matters for a wait.)
    row0 = pl.multiple_of(slot * c, c)
    uview = ubuf.at[pl.ds(row0, c)]
    bview = bbuf.at[pl.ds(row0, c)]
    pltpu.make_async_copy(uview, uview, usem.at[slot]).wait()
    pltpu.make_async_copy(bview, bview, bsem.at[slot]).wait()

    u_rows = ubuf[pl.ds(row0, c), :]
    b_rows = bbuf[pl.ds(row0, c), :]
    news = jnp.dot(b_rows, w_ref[...], preferred_element_type=jnp.float32)
    news = jax.nn.sigmoid(news + b_ref[...])
    row_dot = jnp.sum(u_rows * news, axis=1)
    out_ref[...] = jnp.reshape(jax.nn.sigmoid(row_dot), (1, c))


# --------------------------------------------------------------------------
# Wrapper
# --------------------------------------------------------------------------
def content_based_forward(users, items, tpu_params, *, tile_batch=None,
                          vmem_tables=None, hbm_chunk=256):
    """JAX wrapper mirroring ContentBasedModel.forward(users, items).

    `tpu_params` are the lane-padded params from `pad_params_for_tpu`.
    `vmem_tables=None` auto-selects the VMEM-resident fast path whenever both
    embedding tables fit ~70% of this chip's VMEM (v7x ~45 MiB, v5e/v6e ~90 MiB);
    pass False to force the chunked, double-buffered HBM-DMA path.
    """
    user_table = tpu_params["user_embeddings"]        # (num_users, E_pad) f32
    bert_table = tpu_params["news_bert_embeddings"]   # (num_news,  D_pad) f32, frozen
    w = tpu_params["transform_weight"]                # (D_pad, E_pad) == torch weight.T, padded
    b = tpu_params["transform_bias"]                  # (1, E_pad)

    B = int(users.shape[0])
    d_pad = bert_table.shape[1]
    e_pad = user_table.shape[1]

    cap = _vmem_capacity_bytes()
    table_bytes = (user_table.size + bert_table.size) * 4
    if vmem_tables is None:
        vmem_tables = table_bytes <= int(cap * 0.7)

    # Tile/chunk rows per grid step: forced to a multiple of 128 so the (1, tb)
    # output block is lane-dense and the gather scratch is (8,128)-aligned.
    if tile_batch is None:
        tile_batch = 2048 if vmem_tables else hbm_chunk
    tb = max(LANE, _round_up(min(tile_batch, _round_up(B, LANE)), LANE))
    b_pad = _round_up(B, tb)
    num_tiles = b_pad // tb

    # Clip + pad indices (padded rows gather row 0 harmlessly; sliced away below).
    users_i = jnp.clip(users.astype(jnp.int32), 0, user_table.shape[0] - 1)
    items_i = jnp.clip(items.astype(jnp.int32), 0, bert_table.shape[0] - 1)
    users_pad = jnp.zeros((b_pad,), jnp.int32).at[:B].set(users_i)
    items_pad = jnp.zeros((b_pad,), jnp.int32).at[:B].set(items_i)

    vmem_spec = pl.BlockSpec(memory_space=pltpu.MemorySpace.VMEM)
    out_spec = pl.BlockSpec((1, tb), lambda i, u, it: (0, i))     # lane-dense scores

    if vmem_tables:
        grid_spec = pltpu.PrefetchScalarGridSpec(
            num_scalar_prefetch=2,
            grid=(num_tiles,),
            in_specs=[vmem_spec,    # user table, whole in VMEM (single copy)
                      vmem_spec,    # bert table, whole in VMEM (single copy)
                      vmem_spec,    # W
                      vmem_spec],   # b
            out_specs=out_spec,
            scratch_shapes=[
                pltpu.VMEM((tb, e_pad), jnp.float32),   # gathered user rows
                pltpu.VMEM((tb, d_pad), jnp.float32),   # gathered bert rows
            ],
        )
        kernel = _score_kernel_vmem
        dims = ("parallel",)        # tiles independent; megacore may split them
        scratch_bytes = tb * (e_pad + d_pad) * 4
        needed = table_bytes + (w.size + b.size) * 4 + scratch_bytes + 4 * tb
    else:
        grid_spec = pltpu.PrefetchScalarGridSpec(
            num_scalar_prefetch=2,
            grid=(num_tiles,),
            in_specs=[pl.BlockSpec(memory_space=pl.ANY),   # user table stays in HBM
                      pl.BlockSpec(memory_space=pl.ANY),   # bert table stays in HBM
                      vmem_spec,                           # W
                      vmem_spec],                          # b
            out_specs=out_spec,
            scratch_shapes=[
                pltpu.VMEM((2 * tb, e_pad), jnp.float32),  # 2-slot user row buffer
                pltpu.VMEM((2 * tb, d_pad), jnp.float32),  # 2-slot bert row buffer
                pltpu.SemaphoreType.DMA((2,)),
                pltpu.SemaphoreType.DMA((2,)),
            ],
        )
        kernel = _score_kernel_hbm
        dims = ("arbitrary",)       # sequential: double-buffering spans grid steps
        scratch_bytes = 2 * tb * (e_pad + d_pad) * 4
        needed = (w.size + b.size) * 4 + scratch_bytes + 4 * tb

    vmem_limit = int(min(cap - (4 << 20), max(32 << 20, needed + (8 << 20))))

    cost = pl.CostEstimate(
        flops=int(2 * b_pad * d_pad * e_pad + 3 * b_pad * e_pad),
        transcendentals=int(b_pad * (e_pad + 1)),
        bytes_accessed=int(table_bytes + (w.size + b.size) * 4
                           + b_pad * (e_pad + d_pad + 1) * 4),
    )

    out = pl.pallas_call(
        kernel,
        out_shape=jax.ShapeDtypeStruct((1, b_pad), jnp.float32),
        grid_spec=grid_spec,
        compiler_params=pltpu.CompilerParams(
            dimension_semantics=dims,
            vmem_limit_bytes=vmem_limit,
        ),
        cost_estimate=cost,
    )(users_pad, items_pad, user_table, bert_table, w, b)

    return out[0, :B]   # (B,), like torch's dim-1 sum + sigmoid


def init_params(key, num_users, num_news, embedding_size, bert_dim):
    """Deterministic parameter init matching the PyTorch module's shapes."""
    k_user, k_bert, k_w, k_b = jax.random.split(key, 4)
    # nn.Embedding default init: N(0, 1)
    user_table = jax.random.normal(k_user, (num_users, embedding_size), jnp.float32)
    # frozen pretrained BERT embeddings (synthetic)
    bert_table = jax.random.normal(k_bert, (num_news, bert_dim), jnp.float32)
    # nn.Linear default init: U(-1/sqrt(in), 1/sqrt(in)); store weight transposed (D, E)
    bound = 1.0 / (bert_dim ** 0.5)
    w = jax.random.uniform(k_w, (bert_dim, embedding_size), jnp.float32, -bound, bound)
    b = jax.random.uniform(k_b, (1, embedding_size), jnp.float32, -bound, bound)
    return {
        "user_embeddings": user_table,
        "news_bert_embeddings": bert_table,
        "transform_weight": w,
        "transform_bias": b,
    }


def pad_params_for_tpu(params, lane=LANE):
    """One-time lane padding: E=50 -> 128 and D=64 -> 128.

    Zero padding keeps the math exact: padded user columns are 0 (so the extra
    sigmoid(0)=0.5 news columns contribute nothing), and padded bert columns /
    W rows are 0 (so the matmul sum is unchanged).
    # TODO(synk): optionally store tables as bf16 on v5e to halve HBM footprint.
    """
    e = params["user_embeddings"].shape[1]
    d = params["news_bert_embeddings"].shape[1]
    e_extra = _round_up(e, lane) - e
    d_extra = _round_up(d, lane) - d
    return {
        "user_embeddings": jnp.pad(params["user_embeddings"],
                                   ((0, 0), (0, e_extra))).astype(jnp.float32),
        "news_bert_embeddings": jnp.pad(params["news_bert_embeddings"],
                                        ((0, 0), (0, d_extra))).astype(jnp.float32),
        "transform_weight": jnp.pad(params["transform_weight"],
                                    ((0, d_extra), (0, e_extra))).astype(jnp.float32),
        "transform_bias": jnp.pad(params["transform_bias"],
                                  ((0, 0), (0, e_extra))).astype(jnp.float32),
    }


if __name__ == "__main__":
    key = jax.random.PRNGKey(0)
    num_users, num_news = 32, 48

    k_params, k_data = jax.random.split(key)
    params = init_params(k_params, num_users, num_news, EMBEDDING_SIZE, BERT_DIM)
    tpu_params = pad_params_for_tpu(params)

    def reference(users, items):
        user_emb = jnp.take(params["user_embeddings"], users, axis=0)
        bert_emb = jnp.take(params["news_bert_embeddings"], items, axis=0)
        news_emb = jax.nn.sigmoid(bert_emb @ params["transform_weight"]
                                  + params["transform_bias"])
        return jax.nn.sigmoid(jnp.sum(user_emb * news_emb, axis=1))

    # Cases: small single-tile VMEM path, multi-tile VMEM path, and the forced
    # multi-chunk double-buffered HBM-DMA fallback path.
    cases = [
        (8, dict()),
        (300, dict(tile_batch=128)),
        (300, dict(vmem_tables=False, hbm_chunk=128)),
    ]
    for case_id, (batch, kwargs) in enumerate(cases):
        ku, ki = jax.random.split(jax.random.fold_in(k_data, case_id))
        users = jax.random.randint(ku, (batch,), 0, num_users, jnp.int32)
        items = jax.random.randint(ki, (batch,), 0, num_news, jnp.int32)

        scores = content_based_forward(users, items, tpu_params, **kwargs)
        scores = jax.block_until_ready(scores)
        ref = reference(users, items)

        assert scores.shape == (batch,), (case_id, scores.shape)
        assert jnp.allclose(scores, ref, atol=1e-4, rtol=1e-4), (case_id, scores, ref)

    print("KERNEL_OK")
</pallas_src>

<mosaic_0001>
module attributes {stable_mosaic.version = 11 : i64} {
  func.func @_score_kernel_vmem(%arg0: i32, %arg1: memref<128xi32, #tpu.memory_space<smem>>, %arg2: memref<128xi32, #tpu.memory_space<smem>>, %arg3: memref<32x128xf32, #tpu.memory_space<vmem>>, %arg4: memref<48x128xf32, #tpu.memory_space<vmem>>, %arg5: memref<128x128xf32, #tpu.memory_space<vmem>>, %arg6: memref<1x128xf32, #tpu.memory_space<vmem>>, %arg7: memref<1x128xf32, #tpu.memory_space<vmem>>, %arg8: memref<128x128xf32, #tpu.memory_space<vmem>>, %arg9: memref<128x128xf32, #tpu.memory_space<vmem>>) attributes {dimension_semantics = [#tpu.dimension_semantics<parallel>], iteration_bounds = array<i64: 1>, scalar_prefetch = 2 : i64, scratch_operands = 2 : i64, tpu.core_type = #tpu.core_type<tc>, window_params = [{pipeline_mode = #tpu.pipeline_mode<synchronous>, transform_indices = @transform_0, window_bounds = array<i64: 32, 128>}, {pipeline_mode = #tpu.pipeline_mode<synchronous>, transform_indices = @transform_1, window_bounds = array<i64: 48, 128>}, {pipeline_mode = #tpu.pipeline_mode<synchronous>, transform_indices = @transform_2, window_bounds = array<i64: 128, 128>}, {pipeline_mode = #tpu.pipeline_mode<synchronous>, transform_indices = @transform_3, window_bounds = array<i64: 1, 128>}, {transform_indices = @transform_4, window_bounds = array<i64: 1, 128>}]} {
    %c128_i32 = arith.constant 128 : i32
    %0 = arith.muli %arg0, %c128_i32 : i32
    %c0_i32 = arith.constant 0 : i32
    %c128_i32_0 = arith.constant 128 : i32
    %1 = arith.addi %c0_i32, %c128_i32_0 : i32
    %c1_i32 = arith.constant 1 : i32
    scf.for %arg10 = %c0_i32 to %1 step %c1_i32  : i32 {
      %c1_i32_14 = arith.constant 1 : i32
      %23 = arith.muli %arg10, %c1_i32_14 : i32
      %c0_i32_15 = arith.constant 0 : i32
      %24 = arith.addi %c0_i32_15, %23 : i32
      %25 = arith.addi %0, %24 : i32
      %26 = arith.index_cast %25 : i32 to index
      %27 = memref.load %arg1[%26] : memref<128xi32, #tpu.memory_space<smem>>
      %28 = arith.addi %0, %24 : i32
      %29 = arith.index_cast %28 : i32 to index
      %30 = memref.load %arg2[%29] : memref<128xi32, #tpu.memory_space<smem>>
      %31 = arith.index_cast %27 : i32 to index
      %c0_16 = arith.constant 0 : index
      %32 = vector.load %arg3[%31, %c0_16] : memref<32x128xf32, #tpu.memory_space<vmem>>, vector<1x128xf32>
      %33 = arith.index_cast %24 : i32 to index
      %c0_17 = arith.constant 0 : index
      %34 = vector.load %arg8[%33, %c0_17] : memref<128x128xf32, #tpu.memory_space<vmem>>, vector<1x128xf32>
      tpu.vector_store %arg8[%33, %c0_17], %32 {strides = array<i32>} : memref<128x128xf32, #tpu.memory_space<vmem>>, vector<1x128xf32>,
      %35 = arith.index_cast %30 : i32 to index
      %c0_18 = arith.constant 0 : index
      %36 = vector.load %arg4[%35, %c0_18] : memref<48x128xf32, #tpu.memory_space<vmem>>, vector<1x128xf32>
      %37 = arith.index_cast %24 : i32 to index
      %c0_19 = arith.constant 0 : index
      %38 = vector.load %arg9[%37, %c0_19] : memref<128x128xf32, #tpu.memory_space<vmem>>, vector<1x128xf32>
      tpu.vector_store %arg9[%37, %c0_19], %36 {strides = array<i32>} : memref<128x128xf32, #tpu.memory_space<vmem>>, vector<1x128xf32>,
    }
    %c128_i32_1 = arith.constant 128 : i32
    %c0 = arith.constant 0 : index
    %c0_2 = arith.constant 0 : index
    %2 = vector.load %arg9[%c0, %c0_2] : memref<128x128xf32, #tpu.memory_space<vmem>>, vector<128x128xf32>
    %c0_3 = arith.constant 0 : index
    %c0_4 = arith.constant 0 : index
    %3 = vector.load %arg5[%c0_3, %c0_4] : memref<128x128xf32, #tpu.memory_space<vmem>>, vector<128x128xf32>
    %cst = arith.constant dense<0.000000e+00> : vector<128x128xf32>
    %4 = tpu.matmul %2, %3, %cst {dimension_numbers = #tpu.dot_dimension_numbers<[1], [0], [0], [1], [0, 0, 1, 1], [], []>} : vector<128x128xf32>, vector<128x128xf32>, vector<128x128xf32> -> vector<128x128xf32>
    %c0_5 = arith.constant 0 : index
    %c0_6 = arith.constant 0 : index
    %5 = vector.load %arg6[%c0_5, %c0_6] : memref<1x128xf32, #tpu.memory_space<vmem>>, vector<1x128xf32>
    %6 = vector.broadcast %5 : vector<1x128xf32> to vector<128x128xf32>
    %7 = arith.addf %4, %6 : vector<128x128xf32>
    %8 = arith.negf %7 : vector<128x128xf32>
    %9 = math.exp %8 : vector<128x128xf32>
    %cst_7 = arith.constant 1.000000e+00 : f32
    %10 = vector.broadcast %cst_7 : f32 to vector<128x128xf32>
    %11 = arith.addf %10, %9 : vector<128x128xf32>
    %12 = arith.divf %10, %11 : vector<128x128xf32>
    %c0_8 = arith.constant 0 : index
    %c0_9 = arith.constant 0 : index
    %13 = vector.load %arg8[%c0_8, %c0_9] : memref<128x128xf32, #tpu.memory_space<vmem>>, vector<128x128xf32>
    %14 = arith.mulf %13, %12 : vector<128x128xf32>
    %cst_10 = arith.constant dense<0.000000e+00> : vector<128xf32>
    %15 = vector.multi_reduction <add>, %14, %cst_10 [1] : vector<128x128xf32> to vector<128xf32>
    %16 = arith.negf %15 : vector<128xf32>
    %17 = math.exp %16 : vector<128xf32>
    %cst_11 = arith.constant 1.000000e+00 : f32
    %18 = vector.broadcast %cst_11 : f32 to vector<128xf32>
    %19 = arith.addf %18, %17 : vector<128xf32>
    %20 = arith.divf %18, %19 : vector<128xf32>
    %21 = vector.shape_cast %20 : vector<128xf32> to vector<1x128xf32>
    %c0_12 = arith.constant 0 : index
    %c0_13 = arith.constant 0 : index
    %22 = vector.load %arg7[%c0_12, %c0_13] : memref<1x128xf32, #tpu.memory_space<vmem>>, vector<1x128xf32>
    tpu.vector_store %arg7[%c0_12, %c0_13], %21 {strides = array<i32>} : memref<1x128xf32, #tpu.memory_space<vmem>>, vector<1x128xf32>,
    return
  }
  func.func @transform_0(%arg0: i32, %arg1: memref<128xi32, #tpu.memory_space<smem>>, %arg2: memref<128xi32, #tpu.memory_space<smem>>) -> (i32, i32) {
    %c0_i32 = arith.constant 0 : i32
    %c0_i32_0 = arith.constant 0 : i32
    %c0_i32_1 = arith.constant 0 : i32
    return %c0_i32, %c0_i32_0 : i32, i32
  }
  func.func @transform_1(%arg0: i32, %arg1: memref<128xi32, #tpu.memory_space<smem>>, %arg2: memref<128xi32, #tpu.memory_space<smem>>) -> (i32, i32) {
    %c0_i32 = arith.constant 0 : i32
    %c0_i32_0 = arith.constant 0 : i32
    %c0_i32_1 = arith.constant 0 : i32
    return %c0_i32, %c0_i32_0 : i32, i32
  }
  func.func @transform_2(%arg0: i32, %arg1: memref<128xi32, #tpu.memory_space<smem>>, %arg2: memref<128xi32, #tpu.memory_space<smem>>) -> (i32, i32) {
    %c0_i32 = arith.constant 0 : i32
    %c0_i32_0 = arith.constant 0 : i32
    %c0_i32_1 = arith.constant 0 : i32
    return %c0_i32, %c0_i32_0 : i32, i32
  }
  func.func @transform_3(%arg0: i32, %arg1: memref<128xi32, #tpu.memory_space<smem>>, %arg2: memref<128xi32, #tpu.memory_space<smem>>) -> (i32, i32) {
    %c0_i32 = arith.constant 0 : i32
    %c0_i32_0 = arith.constant 0 : i32
    %c0_i32_1 = arith.constant 0 : i32
    return %c0_i32, %c0_i32_0 : i32, i32
  }
  func.func @transform_4(%arg0: i32, %arg1: memref<128xi32, #tpu.memory_space<smem>>, %arg2: memref<128xi32, #tpu.memory_space<smem>>) -> (i32, i32) {
    %c0_i32 = arith.constant 0 : i32
    %c0_i32_0 = arith.constant 0 : i32
    return %c0_i32, %arg0 : i32, i32
  }
}

</mosaic_0001>

<llo_original>
// kernel: tpu_custom_call.1
$region0: #{tpu_custom_call.1}
  #allocation0 [shape = 'u32[]', space=smem, size = 0x4, offset = 0x4, fixed_abs, tag = 'smem constant byte address 0x4 - core index']
  #allocation1 [shape = 'u32[72,128]{1,0:T(1,128)}', space=vmem, size = 0x9000, scoped, tag = 'internal scratch']
  #allocation2 [shape = 'f32[128,128]{1,0:T(8,128)}', space=vmem, size = 0x10000, scoped, tag = 'scratch operand']
  #allocation3 [shape = 'f32[128,128]{1,0:T(8,128)}', space=vmem, size = 0x10000, scoped, tag = 'scratch operand']
  #allocation4 [shape = 's32[1]{0}', space=sflag, size = 0x4, scoped, tag = 'scoped memory for tpu_custom_call.1']
  #allocation5 [shape = 'u8[512]{0}', space=smem, size = 0x200, scoped, tag = 'prefetched SMEM operand 0']
  #allocation6 [shape = 'u8[512]{0}', space=smem, size = 0x200, scoped, tag = 'prefetched SMEM operand 1']
  %s0 = inlined_call_operand.hbm [shape: s32[128], index: 0, kind: input, shape index: {}]
  %s1 = inlined_call_operand.hbm [shape: s32[128], index: 1, kind: input, shape index: {}]
  %s2 = inlined_call_operand.hbm [shape: f32[32,128], index: 2, kind: input, shape index: {}]
  %s3 = inlined_call_operand.hbm [shape: f32[48,128], index: 3, kind: input, shape index: {}]
  %s4 = inlined_call_operand.hbm [shape: f32[128,128], index: 4, kind: input, shape index: {}]
  %s5 = inlined_call_operand.vmem [shape: f32[1,128], index: 5, kind: input, shape index: {}]
  %s6 = inlined_call_operand.hbm [shape: f32[1,128], index: 6, kind: output, shape index: {}]
  %s7 = sld [smem:[#allocation0]]
  $region45: #{tpu_custom_call.1} parent=0
    _
  %s9 = ssub.s32 1, %s7
  %s10 = scalar_select 0, %s9, %s7
  %s12 = sshll.u32 %s0, 4
  %s13 = int_to_ptr.hbm [resolvable:$true] %s12
  %15 = dma.hbm_to_smem %s13, 16, [#allocation5], [#allocation4]
  %s17 = sshll.u32 %s1, 4
  %s18 = int_to_ptr.hbm [resolvable:$true] %s17
  %20 = dma.hbm_to_smem %s18, 16, [#allocation6], [#allocation4]
  %22 = dma.done [#allocation4], 32
  %23 = sfence
  $region1: #{tpu_custom_call.1} parent=0
    #allocation7 [shape = 'u8[16384]{0}', space=vmem, size = 0x4000, scoped, tag = 'input window, operand 2, single buffered']
    #allocation8 [shape = 's32[1]{0}', space=sflag, size = 0x4, scoped, tag = 'scoped memory for tpu_custom_call.1']
    #allocation9 [shape = 's32[1]{0}', space=sflag, size = 0x4, scoped, tag = 'scoped memory for tpu_custom_call.1']
    #allocation10 [shape = 'u8[24576]{0}', space=vmem, size = 0x6000, scoped, tag = 'input window, operand 3, single buffered']
    #allocation11 [shape = 's32[1]{0}', space=sflag, size = 0x4, scoped, tag = 'scoped memory for tpu_custom_call.1']
    #allocation12 [shape = 'u8[65536]{0}', space=vmem, size = 0x10000, scoped, tag = 'input window, operand 4, single buffered']
    #allocation13 [shape = 'u8[512]{0}', space=vmem, size = 0x400, scoped, tag = 'output window, operand 0, single buffered']
    %24 = vsyncpa [#allocation8], 0
    %25 = vsyncpa [#allocation11], 0
    %26 = vsyncpa [#allocation9], 0
    // Predicated region
    $region2: #{tpu_custom_call.1} parent=1 // pred_check
      _
    $region3: #{tpu_custom_call.1} parent=1 // pred_check_branch
      %28 = sbr.rel (0) target = $region5
    $region4: #{tpu_custom_call.1} parent=1 // pred_region
      %30 = vsyncadd [#allocation8], 0
      %s31 = sshll.u32 %s2, 4
      %s32 = int_to_ptr.hbm [resolvable:$true] %s31
      %s33 = sshll.u32 [#allocation7], 4
      %s34 = int_to_ptr.vmem [resolvable:$true] %s33
      %39 = dma.hbm_to_vmem [thread:$0]  %s32, 512, %s34, [#allocation8], 128, 128, 8
    $region5: #{tpu_custom_call.1} parent=1 // pred_fallthru
      _
    // Predicated region
    $region6: #{tpu_custom_call.1} parent=1 // pred_check
      _
    $region7: #{tpu_custom_call.1} parent=1 // pred_check_branch
      %41 = sbr.rel (0) target = $region9
    $region8: #{tpu_custom_call.1} parent=1 // pred_region
      %43 = vsyncadd [#allocation11], 0
      %s44 = sshll.u32 %s3, 4
      %s45 = int_to_ptr.hbm [resolvable:$true] %s44
      %s46 = sshll.u32 [#allocation10], 4
      %s47 = int_to_ptr.vmem [resolvable:$true] %s46
      %52 = dma.hbm_to_vmem [thread:$0]  %s45, 768, %s47, [#allocation11], 128, 128, 8
    $region9: #{tpu_custom_call.1} parent=1 // pred_fallthru
      _
    // Predicated region
    $region10: #{tpu_custom_call.1} parent=1 // pred_check
      _
    $region11: #{tpu_custom_call.1} parent=1 // pred_check_branch
      %54 = sbr.rel (0) target = $region13
    $region12: #{tpu_custom_call.1} parent=1 // pred_region
      %56 = vsyncadd [#allocation11], 0
      %s57 = sshll.u32 %s4, 4
      %s58 = int_to_ptr.hbm [resolvable:$true] %s57
      %s59 = sshll.u32 [#allocation12], 4
      %s60 = int_to_ptr.vmem [resolvable:$true] %s59
      %65 = dma.hbm_to_vmem [thread:$0]  %s58, 2048, %s60, [#allocation11], 128, 128, 8
    $region13: #{tpu_custom_call.1} parent=1 // pred_fallthru
      _
    // Predicated region
    $region14: #{tpu_custom_call.1} parent=1 // pred_check
      _
    $region15: #{tpu_custom_call.1} parent=1 // pred_check_branch
      %67 = sbr.rel (0) target = $region17
    $region16: #{tpu_custom_call.1} parent=1 // pred_region
      _
    $region17: #{tpu_custom_call.1} parent=1 // pred_fallthru
      _
    // Predicated region
    $region18: #{tpu_custom_call.1} parent=1 // pred_check
      _
    $region19: #{tpu_custom_call.1} parent=1 // pred_check_branch
      %69 = sbr.rel (0) target = $region21
    $region20: #{tpu_custom_call.1} parent=1 // pred_region
      %71 = dma.done [#allocation8], 512
    $region21: #{tpu_custom_call.1} parent=1 // pred_fallthru
      _
    // Predicated region
    $region22: #{tpu_custom_call.1} parent=1 // pred_check
      _
    $region23: #{tpu_custom_call.1} parent=1 // pred_check_branch
      %73 = sbr.rel (0) target = $region25
    $region24: #{tpu_custom_call.1} parent=1 // pred_region
      %75 = dma.done [#allocation11], 768
    $region25: #{tpu_custom_call.1} parent=1 // pred_fallthru
      _
    // Predicated region
    $region26: #{tpu_custom_call.1} parent=1 // pred_check
      _
    $region27: #{tpu_custom_call.1} parent=1 // pred_check_branch
      %77 = sbr.rel (0) target = $region29
    $region28: #{tpu_custom_call.1} parent=1 // pred_region
      %79 = dma.done [#allocation11], 2048
    $region29: #{tpu_custom_call.1} parent=1 // pred_fallthru
      _
    %s80 = smul.u32 0, 128
    loop: start=0, step=1, limit=128
    $region30: #{tpu_custom_call.1} parent=1 // loop_pre_header
      _
    $region31: #{tpu_custom_call.1} parent=1 // loop_header
      %s82 = sphi 0, %s86
      %p83 = scmp.ge.s32.totalorder %s82, 128
    $region32: #{tpu_custom_call.1} parent=1 // loop_header_branch
      %85 = sbr.rel (%p83) target = $region36
    $region33: #{tpu_custom_call.1} parent=1 // loop_body
      %s87 = sadd.s32 %s80, %s82
      %s88 = sld [smem:[#allocation5 + %s87]]
      %s89 = sld [smem:[#allocation6 + %s87]]
      %s90 = scalar_lea.vmem [#allocation7], %s88
      %v91 = vld [vmem:[%s90] sm:$0x1]
      %s92 = scalar_lea.vmem [#allocation2], %s82
      %93 = vst [vmem:[%s92] sm:$0x1] %v91
      %s94 = scalar_lea.vmem [#allocation10], %s89
      %v95 = vld [vmem:[%s94] sm:$0x1]
      %s96 = scalar_lea.vmem [#allocation3], %s82
      %97 = vst [vmem:[%s96] sm:$0x1] %v95
    $region34: #{tpu_custom_call.1} parent=1 // loop_footer
      %s86 = sadd.s32 1, %s82
    $region35: #{tpu_custom_call.1} parent=1 // loop_footer_branch
      %81 = sbr.rel target = $region31
    $region36: #{tpu_custom_call.1} parent=1 // loop_exit
      _
    %v98 = vld [vmem:[#allocation3] sm:$0xff]
    %v99 = vld [vmem:[#allocation3 + $0x8] sm:$0xff]
    %v100 = vld [vmem:[#allocation3 + $0x10] sm:$0xff]
    %v101 = vld [vmem:[#allocation3 + $0x18] sm:$0xff]
    %v102 = vld [vmem:[#allocation3 + $0x20] sm:$0xff]
    %v103 = vld [vmem:[#allocation3 + $0x28] sm:$0xff]
    %v104 = vld [vmem:[#allocation3 + $0x30] sm:$0xff]
    %v105 = vld [vmem:[#allocation3 + $0x38] sm:$0xff]
    %v106 = vld [vmem:[#allocation3 + $0x40] sm:$0xff]
    %v107 = vld [vmem:[#allocation3 + $0x48] sm:$0xff]
    %v108 = vld [vmem:[#allocation3 + $0x50] sm:$0xff]
    %v109 = vld [vmem:[#allocation3 + $0x58] sm:$0xff]
    %v110 = vld [vmem:[#allocation3 + $0x60] sm:$0xff]
    %v111 = vld [vmem:[#allocation3 + $0x68] sm:$0xff]
    %v112 = vld [vmem:[#allocation3 + $0x70] sm:$0xff]
    %v113 = vld [vmem:[#allocation3 + $0x78] sm:$0xff]
    %v114 = vld [vmem:[#allocation12] sm:$0xff]
    %v115 = vld [vmem:[#allocation12 + $0x8] sm:$0xff]
    %v116 = vld [vmem:[#allocation12 + $0x10] sm:$0xff]
    %v117 = vld [vmem:[#allocation12 + $0x18] sm:$0xff]
    %v118 = vld [vmem:[#allocation12 + $0x20] sm:$0xff]
    %v119 = vld [vmem:[#allocation12 + $0x28] sm:$0xff]
    %v120 = vld [vmem:[#allocation12 + $0x30] sm:$0xff]
    %v121 = vld [vmem:[#allocation12 + $0x38] sm:$0xff]
    %v122 = vld [vmem:[#allocation12 + $0x40] sm:$0xff]
    %v123 = vld [vmem:[#allocation12 + $0x48] sm:$0xff]
    %v124 = vld [vmem:[#allocation12 + $0x50] sm:$0xff]
    %v125 = vld [vmem:[#allocation12 + $0x58] sm:$0xff]
    %v126 = vld [vmem:[#allocation12 + $0x60] sm:$0xff]
    %v127 = vld [vmem:[#allocation12 + $0x68] sm:$0xff]
    %v128 = vld [vmem:[#allocation12 + $0x70] sm:$0xff]
    %v129 = vld [vmem:[#allocation12 + $0x78] sm:$0xff]
    %v130 = vld [vmem:[%s5] sm:$0x1]
    %v132 = vperm.slane %v130, 0
    %134 = vmatpush.msra.mxu0 %v129
    %135 = vmatpush.msra.mxu0 %v128
    %136 = vmatpush.msra.mxu0 %v127
    %137 = vmatpush.msra.mxu0 %v126
    %138 = vmatpush.msra.mxu0 %v125
    %139 = vmatpush.msra.mxu0 %v124
    %140 = vmatpush.msra.mxu0 %v123
    %141 = vmatpush.msra.mxu0 %v122
    %142 = vmatpush.msra.mxu0 %v121
    %143 = vmatpush.msra.mxu0 %v120
    %144 = vmatpush.msra.mxu0 %v119
    %145 = vmatpush.msra.mxu0 %v118
    %146 = vmatpush.msra.mxu0 %v117
    %147 = vmatpush.msra.mxu0 %v116
    %148 = vmatpush.msra.mxu0 %v115
    %149 = vmatpush.msra.mxu0 %v114
    %150 = vmatmul.f32.gmra.mxu0 %v98
    %v151 = vpop.f32.mrf.mxu0
    %v152 = vadd.f32 %v132, %v151
    %153 = vmatmul.f32.gmra.mxu0 %v99
    %v154 = vpop.f32.mrf.mxu0
    %v155 = vadd.f32 %v132, %v154
    %156 = vmatmul.f32.gmra.mxu0 %v100
    %v157 = vpop.f32.mrf.mxu0
    %v158 = vadd.f32 %v132, %v157
    %159 = vmatmul.f32.gmra.mxu0 %v101
    %v160 = vpop.f32.mrf.mxu0
    %v161 = vadd.f32 %v132, %v160
    %162 = vmatmul.f32.gmra.mxu0 %v102
    %v163 = vpop.f32.mrf.mxu0
    %v164 = vadd.f32 %v132, %v163
    %165 = vmatmul.f32.gmra.mxu0 %v103
    %v166 = vpop.f32.mrf.mxu0
    %v167 = vadd.f32 %v132, %v166
    %168 = vmatmul.f32.gmra.mxu0 %v104
    %v169 = vpop.f32.mrf.mxu0
    %v170 = vadd.f32 %v132, %v169
    %171 = vmatmul.f32.gmra.mxu0 %v105
    %v172 = vpop.f32.mrf.mxu0
    %v173 = vadd.f32 %v132, %v172
    %174 = vmatmul.f32.gmra.mxu0 %v106
    %v175 = vpop.f32.mrf.mxu0
    %v176 = vadd.f32 %v132, %v175
    %177 = vmatmul.f32.gmra.mxu0 %v107
    %v178 = vpop.f32.mrf.mxu0
    %v179 = vadd.f32 %v132, %v178
    %180 = vmatmul.f32.gmra.mxu0 %v108
    %v181 = vpop.f32.mrf.mxu0
    %v182 = vadd.f32 %v132, %v181
    %183 = vmatmul.f32.gmra.mxu0 %v109
    %v184 = vpop.f32.mrf.mxu0
    %v185 = vadd.f32 %v132, %v184
    %186 = vmatmul.f32.gmra.mxu0 %v110
    %v187 = vpop.f32.mrf.mxu0
    %v188 = vadd.f32 %v132, %v187
    %189 = vmatmul.f32.gmra.mxu0 %v111
    %v190 = vpop.f32.mrf.mxu0
    %v191 = vadd.f32 %v132, %v190
    %192 = vmatmul.f32.gmra.mxu0 %v112
    %v193 = vpop.f32.mrf.mxu0
    %v194 = vadd.f32 %v132, %v193
    %195 = vmatmul.f32.gmra.mxu0 %v113
    %v196 = vpop.f32.mrf.mxu0
    %v197 = vadd.f32 %v132, %v196
    %198 = vdwg.mxu0
    %v199 = vxor.u32 %v152, 2147483648
    %v200 = vxor.u32 %v155, 2147483648
    %v201 = vxor.u32 %v158, 2147483648
    %v202 = vxor.u32 %v161, 2147483648
    %v203 = vxor.u32 %v164, 2147483648
    %v204 = vxor.u32 %v167, 2147483648
    %v205 = vxor.u32 %v170, 2147483648
    %v206 = vxor.u32 %v173, 2147483648
    %v207 = vxor.u32 %v176, 2147483648
    %v208 = vxor.u32 %v179, 2147483648
    %v209 = vxor.u32 %v182, 2147483648
    %v210 = vxor.u32 %v185, 2147483648
    %v211 = vxor.u32 %v188, 2147483648
    %v212 = vxor.u32 %v191, 2147483648
    %v213 = vxor.u32 %v194, 2147483648
    %v214 = vxor.u32 %v197, 2147483648
    %v215 = vmul.f32 %v199, 1.442695
    %v216 = vpow.pop %v215
    %v217 = vmul.f32 %v200, 1.442695
    %v218 = vpow.pop %v217
    %v219 = vmul.f32 %v201, 1.442695
    %v220 = vpow.pop %v219
    %v221 = vmul.f32 %v202, 1.442695
    %v222 = vpow.pop %v221
    %v223 = vmul.f32 %v203, 1.442695
    %v224 = vpow.pop %v223
    %v225 = vmul.f32 %v204, 1.442695
    %v226 = vpow.pop %v225
    %v227 = vmul.f32 %v205, 1.442695
    %v228 = vpow.pop %v227
    %v229 = vmul.f32 %v206, 1.442695
    %v230 = vpow.pop %v229
    %v231 = vmul.f32 %v207, 1.442695
    %v232 = vpow.pop %v231
    %v233 = vmul.f32 %v208, 1.442695
    %v234 = vpow.pop %v233
    %v235 = vmul.f32 %v209, 1.442695
    %v236 = vpow.pop %v235
    %v237 = vmul.f32 %v210, 1.442695
    %v238 = vpow.pop %v237
    %v239 = vmul.f32 %v211, 1.442695
    %v240 = vpow.pop %v239
    %v241 = vmul.f32 %v212, 1.442695
    %v242 = vpow.pop %v241
    %v243 = vmul.f32 %v213, 1.442695
    %v244 = vpow.pop %v243
    %v245 = vmul.f32 %v214, 1.442695
    %v246 = vpow.pop %v245
    %v247 = vadd.f32 %v216, 1.0
    %v248 = vadd.f32 %v218, 1.0
    %v249 = vadd.f32 %v220, 1.0
    %v250 = vadd.f32 %v222, 1.0
    %v251 = vadd.f32 %v224, 1.0
    %v252 = vadd.f32 %v226, 1.0
    %v253 = vadd.f32 %v228, 1.0
    %v254 = vadd.f32 %v230, 1.0
    %v255 = vadd.f32 %v232, 1.0
    %v256 = vadd.f32 %v234, 1.0
    %v257 = vadd.f32 %v236, 1.0
    %v258 = vadd.f32 %v238, 1.0
    %v259 = vadd.f32 %v240, 1.0
    %v260 = vadd.f32 %v242, 1.0
    %v261 = vadd.f32 %v244, 1.0
    %v262 = vadd.f32 %v246, 1.0
    %v263 = vrcp.pop %v247
    %v264 = vmul.f32 %v247, %v263
    %v265 = vsub.f32 1.0, %v264
    %v266 = vmul.f32 %v263, %v265
    %v267 = vadd.f32 %v263, %v266
    %vm268 = vweird.f32 %v247
    %vm269 = vweird.f32 %v263
    %vm270 = vmor %vm268, %vm269
    %v271 = vsel %vm270, %v263, %v267
    %v272 = vand.u32 2147483647, %v247
    %vm273 = vcmp.eq.f32.partialorder %v272, 8.507059e+37
    %v274 = vand.u32 %v247, 2147483648
    %v275 = vor.u32 1.1754944e-38, %v274
    %v276 = vsel %vm273, %v275, %v271
    %v277 = vmul.f32 1.0, %v276
    %v278 = vrcp.pop %v248
    %v279 = vmul.f32 %v248, %v278
    %v280 = vsub.f32 1.0, %v279
    %v281 = vmul.f32 %v278, %v280
    %v282 = vadd.f32 %v278, %v281
    %vm283 = vweird.f32 %v248
    %vm284 = vweird.f32 %v278
    %vm285 = vmor %vm283, %vm284
    %v286 = vsel %vm285, %v278, %v282
    %v287 = vand.u32 2147483647, %v248
    %vm288 = vcmp.eq.f32.partialorder %v287, 8.507059e+37
    %v289 = vand.u32 %v248, 2147483648
    %v290 = vor.u32 1.1754944e-38, %v289
    %v291 = vsel %vm288, %v290, %v286
    %v292 = vmul.f32 1.0, %v291
    %v293 = vrcp.pop %v249
    %v294 = vmul.f32 %v249, %v293
    %v295 = vsub.f32 1.0, %v294
    %v296 = vmul.f32 %v293, %v295
    %v297 = vadd.f32 %v293, %v296
    %vm298 = vweird.f32 %v249
    %vm299 = vweird.f32 %v293
    %vm300 = vmor %vm298, %vm299
    %v301 = vsel %vm300, %v293, %v297
    %v302 = vand.u32 2147483647, %v249
    %vm303 = vcmp.eq.f32.partialorder %v302, 8.507059e+37
    %v304 = vand.u32 %v249, 2147483648
    %v305 = vor.u32 1.1754944e-38, %v304
    %v306 = vsel %vm303, %v305, %v301
    %v307 = vmul.f32 1.0, %v306
    %v308 = vrcp.pop %v250
    %v309 = vmul.f32 %v250, %v308
    %v310 = vsub.f32 1.0, %v309
    %v311 = vmul.f32 %v308, %v310
    %v312 = vadd.f32 %v308, %v311
    %vm313 = vweird.f32 %v250
    %vm314 = vweird.f32 %v308
    %vm315 = vmor %vm313, %vm314
    %v316 = vsel %vm315, %v308, %v312
    %v317 = vand.u32 2147483647, %v250
    %vm318 = vcmp.eq.f32.partialorder %v317, 8.507059e+37
    %v319 = vand.u32 %v250, 2147483648
    %v320 = vor.u32 1.1754944e-38, %v319
    %v321 = vsel %vm318, %v320, %v316
    %v322 = vmul.f32 1.0, %v321
    %v323 = vrcp.pop %v251
    %v324 = vmul.f32 %v251, %v323
    %v325 = vsub.f32 1.0, %v324
    %v326 = vmul.f32 %v323, %v325
    %v327 = vadd.f32 %v323, %v326
    %vm328 = vweird.f32 %v251
    %vm329 = vweird.f32 %v323
    %vm330 = vmor %vm328, %vm329
    %v331 = vsel %vm330, %v323, %v327
    %v332 = vand.u32 2147483647, %v251
    %vm333 = vcmp.eq.f32.partialorder %v332, 8.507059e+37
    %v334 = vand.u32 %v251, 2147483648
    %v335 = vor.u32 1.1754944e-38, %v334
    %v336 = vsel %vm333, %v335, %v331
    %v337 = vmul.f32 1.0, %v336
    %v338 = vrcp.pop %v252
    %v339 = vmul.f32 %v252, %v338
    %v340 = vsub.f32 1.0, %v339
    %v341 = vmul.f32 %v338, %v340
    %v342 = vadd.f32 %v338, %v341
    %vm343 = vweird.f32 %v252
    %vm344 = vweird.f32 %v338
    %vm345 = vmor %vm343, %vm344
    %v346 = vsel %vm345, %v338, %v342
    %v347 = vand.u32 2147483647, %v252
    %vm348 = vcmp.eq.f32.partialorder %v347, 8.507059e+37
    %v349 = vand.u32 %v252, 2147483648
    %v350 = vor.u32 1.1754944e-38, %v349
    %v351 = vsel %vm348, %v350, %v346
    %v352 = vmul.f32 1.0, %v351
    %v353 = vrcp.pop %v253
    %v354 = vmul.f32 %v253, %v353
    %v355 = vsub.f32 1.0, %v354
    %v356 = vmul.f32 %v353, %v355
    %v357 = vadd.f32 %v353, %v356
    %vm358 = vweird.f32 %v253
    %vm359 = vweird.f32 %v353
    %vm360 = vmor %vm358, %vm359
    %v361 = vsel %vm360, %v353, %v357
    %v362 = vand.u32 2147483647, %v253
    %vm363 = vcmp.eq.f32.partialorder %v362, 8.507059e+37
    %v364 = vand.u32 %v253, 2147483648
    %v365 = vor.u32 1.1754944e-38, %v364
    %v366 = vsel %vm363, %v365, %v361
    %v367 = vmul.f32 1.0, %v366
    %v368 = vrcp.pop %v254
    %v369 = vmul.f32 %v254, %v368
    %v370 = vsub.f32 1.0, %v369
    %v371 = vmul.f32 %v368, %v370
    %v372 = vadd.f32 %v368, %v371
    %vm373 = vweird.f32 %v254
    %vm374 = vweird.f32 %v368
    %vm375 = vmor %vm373, %vm374
    %v376 = vsel %vm375, %v368, %v372
    %v377 = vand.u32 2147483647, %v254
    %vm378 = vcmp.eq.f32.partialorder %v377, 8.507059e+37
    %v379 = vand.u32 %v254, 2147483648
    %v380 = vor.u32 1.1754944e-38, %v379
    %v381 = vsel %vm378, %v380, %v376
    %v382 = vmul.f32 1.0, %v381
    %v383 = vrcp.pop %v255
    %v384 = vmul.f32 %v255, %v383
    %v385 = vsub.f32 1.0, %v384
    %v386 = vmul.f32 %v383, %v385
    %v387 = vadd.f32 %v383, %v386
    %vm388 = vweird.f32 %v255
    %vm389 = vweird.f32 %v383
    %vm390 = vmor %vm388, %vm389
    %v391 = vsel %vm390, %v383, %v387
    %v392 = vand.u32 2147483647, %v255
    %vm393 = vcmp.eq.f32.partialorder %v392, 8.507059e+37
    %v394 = vand.u32 %v255, 2147483648
    %v395 = vor.u32 1.1754944e-38, %v394
    %v396 = vsel %vm393, %v395, %v391
    %v397 = vmul.f32 1.0, %v396
    %v398 = vrcp.pop %v256
    %v399 = vmul.f32 %v256, %v398
    %v400 = vsub.f32 1.0, %v399
    %v401 = vmul.f32 %v398, %v400
    %v402 = vadd.f32 %v398, %v401
    %vm403 = vweird.f32 %v256
    %vm404 = vweird.f32 %v398
    %vm405 = vmor %vm403, %vm404
    %v406 = vsel %vm405, %v398, %v402
    %v407 = vand.u32 2147483647, %v256
    %vm408 = vcmp.eq.f32.partialorder %v407, 8.507059e+37
    %v409 = vand.u32 %v256, 2147483648
    %v410 = vor.u32 1.1754944e-38, %v409
    %v411 = vsel %vm408, %v410, %v406
    %v412 = vmul.f32 1.0, %v411
    %v413 = vrcp.pop %v257
    %v414 = vmul.f32 %v257, %v413
    %v415 = vsub.f32 1.0, %v414
    %v416 = vmul.f32 %v413, %v415
    %v417 = vadd.f32 %v413, %v416
    %vm418 = vweird.f32 %v257
    %vm419 = vweird.f32 %v413
    %vm420 = vmor %vm418, %vm419
    %v421 = vsel %vm420, %v413, %v417
    %v422 = vand.u32 2147483647, %v257
    %vm423 = vcmp.eq.f32.partialorder %v422, 8.507059e+37
    %v424 = vand.u32 %v257, 2147483648
    %v425 = vor.u32 1.1754944e-38, %v424
    %v426 = vsel %vm423, %v425, %v421
    %v427 = vmul.f32 1.0, %v426
    %v428 = vrcp.pop %v258
    %v429 = vmul.f32 %v258, %v428
    %v430 = vsub.f32 1.0, %v429
    %v431 = vmul.f32 %v428, %v430
    %v432 = vadd.f32 %v428, %v431
    %vm433 = vweird.f32 %v258
    %vm434 = vweird.f32 %v428
    %vm435 = vmor %vm433, %vm434
    %v436 = vsel %vm435, %v428, %v432
    %v437 = vand.u32 2147483647, %v258
    %vm438 = vcmp.eq.f32.partialorder %v437, 8.507059e+37
    %v439 = vand.u32 %v258, 2147483648
    %v440 = vor.u32 1.1754944e-38, %v439
    %v441 = vsel %vm438, %v440, %v436
    %v442 = vmul.f32 1.0, %v441
    %v443 = vrcp.pop %v259
    %v444 = vmul.f32 %v259, %v443
    %v445 = vsub.f32 1.0, %v444
    %v446 = vmul.f32 %v443, %v445
    %v447 = vadd.f32 %v443, %v446
    %vm448 = vweird.f32 %v259
    %vm449 = vweird.f32 %v443
    %vm450 = vmor %vm448, %vm449
    %v451 = vsel %vm450, %v443, %v447
    %v452 = vand.u32 2147483647, %v259
    %vm453 = vcmp.eq.f32.partialorder %v452, 8.507059e+37
    %v454 = vand.u32 %v259, 2147483648
    %v455 = vor.u32 1.1754944e-38, %v454
    %v456 = vsel %vm453, %v455, %v451
    %v457 = vmul.f32 1.0, %v456
    %v458 = vrcp.pop %v260
    %v459 = vmul.f32 %v260, %v458
    %v460 = vsub.f32 1.0, %v459
    %v461 = vmul.f32 %v458, %v460
    %v462 = vadd.f32 %v458, %v461
    %vm463 = vweird.f32 %v260
    %vm464 = vweird.f32 %v458
    %vm465 = vmor %vm463, %vm464
    %v466 = vsel %vm465, %v458, %v462
    %v467 = vand.u32 2147483647, %v260
    %vm468 = vcmp.eq.f32.partialorder %v467, 8.507059e+37
    %v469 = vand.u32 %v260, 2147483648
    %v470 = vor.u32 1.1754944e-38, %v469
    %v471 = vsel %vm468, %v470, %v466
    %v472 = vmul.f32 1.0, %v471
    %v473 = vrcp.pop %v261
    %v474 = vmul.f32 %v261, %v473
    %v475 = vsub.f32 1.0, %v474
    %v476 = vmul.f32 %v473, %v475
    %v477 = vadd.f32 %v473, %v476
    %vm478 = vweird.f32 %v261
    %vm479 = vweird.f32 %v473
    %vm480 = vmor %vm478, %vm479
    %v481 = vsel %vm480, %v473, %v477
    %v482 = vand.u32 2147483647, %v261
    %vm483 = vcmp.eq.f32.partialorder %v482, 8.507059e+37
    %v484 = vand.u32 %v261, 2147483648
    %v485 = vor.u32 1.1754944e-38, %v484
    %v486 = vsel %vm483, %v485, %v481
    %v487 = vmul.f32 1.0, %v486
    %v488 = vrcp.pop %v262
    %v489 = vmul.f32 %v262, %v488
    %v490 = vsub.f32 1.0, %v489
    %v491 = vmul.f32 %v488, %v490
    %v492 = vadd.f32 %v488, %v491
    %vm493 = vweird.f32 %v262
    %vm494 = vweird.f32 %v488
    %vm495 = vmor %vm493, %vm494
    %v496 = vsel %vm495, %v488, %v492
    %v497 = vand.u32 2147483647, %v262
    %vm498 = vcmp.eq.f32.partialorder %v497, 8.507059e+37
    %v499 = vand.u32 %v262, 2147483648
    %v500 = vor.u32 1.1754944e-38, %v499
    %v501 = vsel %vm498, %v500, %v496
    %v502 = vmul.f32 1.0, %v501
    %v503 = vld [vmem:[#allocation2] sm:$0xff]
    %v504 = vld [vmem:[#allocation2 + $0x8] sm:$0xff]
    %v505 = vld [vmem:[#allocation2 + $0x10] sm:$0xff]
    %v506 = vld [vmem:[#allocation2 + $0x18] sm:$0xff]
    %v507 = vld [vmem:[#allocation2 + $0x20] sm:$0xff]
    %v508 = vld [vmem:[#allocation2 + $0x28] sm:$0xff]
    %v509 = vld [vmem:[#allocation2 + $0x30] sm:$0xff]
    %v510 = vld [vmem:[#allocation2 + $0x38] sm:$0xff]
    %v511 = vld [vmem:[#allocation2 + $0x40] sm:$0xff]
    %v512 = vld [vmem:[#allocation2 + $0x48] sm:$0xff]
    %v513 = vld [vmem:[#allocation2 + $0x50] sm:$0xff]
    %v514 = vld [vmem:[#allocation2 + $0x58] sm:$0xff]
    %v515 = vld [vmem:[#allocation2 + $0x60] sm:$0xff]
    %v516 = vld [vmem:[#allocation2 + $0x68] sm:$0xff]
    %v517 = vld [vmem:[#allocation2 + $0x70] sm:$0xff]
    %v518 = vld [vmem:[#allocation2 + $0x78] sm:$0xff]
    %v519 = vmul.f32 %v503, %v277
    %v520 = vmul.f32 %v504, %v292
    %v521 = vmul.f32 %v505, %v307
    %v522 = vmul.f32 %v506, %v322
    %v523 = vmul.f32 %v507, %v337
    %v524 = vmul.f32 %v508, %v352
    %v525 = vmul.f32 %v509, %v367
    %v526 = vmul.f32 %v510, %v382
    %v527 = vmul.f32 %v511, %v397
    %v528 = vmul.f32 %v512, %v412
    %v529 = vmul.f32 %v513, %v427
    %v530 = vmul.f32 %v514, %v442
    %v531 = vmul.f32 %v515, %v457
    %v532 = vmul.f32 %v516, %v472
    %v533 = vmul.f32 %v517, %v487
    %v534 = vmul.f32 %v518, %v502
    %535 = vadd.xlane.f32.xlu0 %v519
    %v536 = vpop.xlane.xlu0 %535
    %537 = vadd.xlane.f32.xlu0 %v520
    %v538 = vpop.xlane.xlu0 %537
    %539 = vadd.xlane.f32.xlu0 %v521
    %v540 = vpop.xlane.xlu0 %539
    %541 = vadd.xlane.f32.xlu0 %v522
    %v542 = vpop.xlane.xlu0 %541
    %543 = vadd.xlane.f32.xlu0 %v523
    %v544 = vpop.xlane.xlu0 %543
    %545 = vadd.xlane.f32.xlu0 %v524
    %v546 = vpop.xlane.xlu0 %545
    %547 = vadd.xlane.f32.xlu0 %v525
    %v548 = vpop.xlane.xlu0 %547
    %549 = vadd.xlane.f32.xlu0 %v526
    %v550 = vpop.xlane.xlu0 %549
    %551 = vadd.xlane.f32.xlu0 %v527
    %v552 = vpop.xlane.xlu0 %551
    %553 = vadd.xlane.f32.xlu0 %v528
    %v554 = vpop.xlane.xlu0 %553
    %555 = vadd.xlane.f32.xlu0 %v529
    %v556 = vpop.xlane.xlu0 %555
    %557 = vadd.xlane.f32.xlu0 %v530
    %v558 = vpop.xlane.xlu0 %557
    %559 = vadd.xlane.f32.xlu0 %v531
    %v560 = vpop.xlane.xlu0 %559
    %561 = vadd.xlane.f32.xlu0 %v532
    %v562 = vpop.xlane.xlu0 %561
    %563 = vadd.xlane.f32.xlu0 %v533
    %v564 = vpop.xlane.xlu0 %563
    %565 = vadd.xlane.f32.xlu0 %v534
    %v566 = vpop.xlane.xlu0 %565
    %v567 = vxor.u32 %v536, 2147483648
    %v568 = vxor.u32 %v538, 2147483648
    %v569 = vxor.u32 %v540, 2147483648
    %v570 = vxor.u32 %v542, 2147483648
    %v571 = vxor.u32 %v544, 2147483648
    %v572 = vxor.u32 %v546, 2147483648
    %v573 = vxor.u32 %v548, 2147483648
    %v574 = vxor.u32 %v550, 2147483648
    %v575 = vxor.u32 %v552, 2147483648
    %v576 = vxor.u32 %v554, 2147483648
    %v577 = vxor.u32 %v556, 2147483648
    %v578 = vxor.u32 %v558, 2147483648
    %v579 = vxor.u32 %v560, 2147483648
    %v580 = vxor.u32 %v562, 2147483648
    %v581 = vxor.u32 %v564, 2147483648
    %v582 = vxor.u32 %v566, 2147483648
    %v583 = vmul.f32 %v567, 1.442695
    %v584 = vpow.pop %v583
    %v585 = vmul.f32 %v568, 1.442695
    %v586 = vpow.pop %v585
    %v587 = vmul.f32 %v569, 1.442695
    %v588 = vpow.pop %v587
    %v589 = vmul.f32 %v570, 1.442695
    %v590 = vpow.pop %v589
    %v591 = vmul.f32 %v571, 1.442695
    %v592 = vpow.pop %v591
    %v593 = vmul.f32 %v572, 1.442695
    %v594 = vpow.pop %v593
    %v595 = vmul.f32 %v573, 1.442695
    %v596 = vpow.pop %v595
    %v597 = vmul.f32 %v574, 1.442695
    %v598 = vpow.pop %v597
    %v599 = vmul.f32 %v575, 1.442695
    %v600 = vpow.pop %v599
    %v601 = vmul.f32 %v576, 1.442695
    %v602 = vpow.pop %v601
    %v603 = vmul.f32 %v577, 1.442695
    %v604 = vpow.pop %v603
    %v605 = vmul.f32 %v578, 1.442695
    %v606 = vpow.pop %v605
    %v607 = vmul.f32 %v579, 1.442695
    %v608 = vpow.pop %v607
    %v609 = vmul.f32 %v580, 1.442695
    %v610 = vpow.pop %v609
    %v611 = vmul.f32 %v581, 1.442695
    %v612 = vpow.pop %v611
    %v613 = vmul.f32 %v582, 1.442695
    %v614 = vpow.pop %v613
    %v615 = vadd.f32 %v584, 1.0
    %v616 = vadd.f32 %v586, 1.0
    %v617 = vadd.f32 %v588, 1.0
    %v618 = vadd.f32 %v590, 1.0
    %v619 = vadd.f32 %v592, 1.0
    %v620 = vadd.f32 %v594, 1.0
    %v621 = vadd.f32 %v596, 1.0
    %v622 = vadd.f32 %v598, 1.0
    %v623 = vadd.f32 %v600, 1.0
    %v624 = vadd.f32 %v602, 1.0
    %v625 = vadd.f32 %v604, 1.0
    %v626 = vadd.f32 %v606, 1.0
    %v627 = vadd.f32 %v608, 1.0
    %v628 = vadd.f32 %v610, 1.0
    %v629 = vadd.f32 %v612, 1.0
    %v630 = vadd.f32 %v614, 1.0
    %v631 = vrcp.pop %v615
    %v632 = vmul.f32 %v615, %v631
    %v633 = vsub.f32 1.0, %v632
    %v634 = vmul.f32 %v631, %v633
    %v635 = vadd.f32 %v631, %v634
    %vm636 = vweird.f32 %v615
    %vm637 = vweird.f32 %v631
    %vm638 = vmor %vm636, %vm637
    %v639 = vsel %vm638, %v631, %v635
    %v640 = vand.u32 2147483647, %v615
    %vm641 = vcmp.eq.f32.partialorder %v640, 8.507059e+37
    %v642 = vand.u32 %v615, 2147483648
    %v643 = vor.u32 1.1754944e-38, %v642
    %v644 = vsel %vm641, %v643, %v639
    %v645 = vmul.f32 1.0, %v644
    %v646 = vrcp.pop %v616
    %v647 = vmul.f32 %v616, %v646
    %v648 = vsub.f32 1.0, %v647
    %v649 = vmul.f32 %v646, %v648
    %v650 = vadd.f32 %v646, %v649
    %vm651 = vweird.f32 %v616
    %vm652 = vweird.f32 %v646
    %vm653 = vmor %vm651, %vm652
    %v654 = vsel %vm653, %v646, %v650
    %v655 = vand.u32 2147483647, %v616
    %vm656 = vcmp.eq.f32.partialorder %v655, 8.507059e+37
    %v657 = vand.u32 %v616, 2147483648
    %v658 = vor.u32 1.1754944e-38, %v657
    %v659 = vsel %vm656, %v658, %v654
    %v660 = vmul.f32 1.0, %v659
    %v661 = vrcp.pop %v617
    %v662 = vmul.f32 %v617, %v661
    %v663 = vsub.f32 1.0, %v662
    %v664 = vmul.f32 %v661, %v663
    %v665 = vadd.f32 %v661, %v664
    %vm666 = vweird.f32 %v617
    %vm667 = vweird.f32 %v661
    %vm668 = vmor %vm666, %vm667
    %v669 = vsel %vm668, %v661, %v665
    %v670 = vand.u32 2147483647, %v617
    %vm671 = vcmp.eq.f32.partialorder %v670, 8.507059e+37
    %v672 = vand.u32 %v617, 2147483648
    %v673 = vor.u32 1.1754944e-38, %v672
    %v674 = vsel %vm671, %v673, %v669
    %v675 = vmul.f32 1.0, %v674
    %v676 = vrcp.pop %v618
    %v677 = vmul.f32 %v618, %v676
    %v678 = vsub.f32 1.0, %v677
    %v679 = vmul.f32 %v676, %v678
    %v680 = vadd.f32 %v676, %v679
    %vm681 = vweird.f32 %v618
    %vm682 = vweird.f32 %v676
    %vm683 = vmor %vm681, %vm682
    %v684 = vsel %vm683, %v676, %v680
    %v685 = vand.u32 2147483647, %v618
    %vm686 = vcmp.eq.f32.partialorder %v685, 8.507059e+37
    %v687 = vand.u32 %v618, 2147483648
    %v688 = vor.u32 1.1754944e-38, %v687
    %v689 = vsel %vm686, %v688, %v684
    %v690 = vmul.f32 1.0, %v689
    %v691 = vrcp.pop %v619
    %v692 = vmul.f32 %v619, %v691
    %v693 = vsub.f32 1.0, %v692
    %v694 = vmul.f32 %v691, %v693
    %v695 = vadd.f32 %v691, %v694
    %vm696 = vweird.f32 %v619
    %vm697 = vweird.f32 %v691
    %vm698 = vmor %vm696, %vm697
    %v699 = vsel %vm698, %v691, %v695
    %v700 = vand.u32 2147483647, %v619
    %vm701 = vcmp.eq.f32.partialorder %v700, 8.507059e+37
    %v702 = vand.u32 %v619, 2147483648
    %v703 = vor.u32 1.1754944e-38, %v702
    %v704 = vsel %vm701, %v703, %v699
    %v705 = vmul.f32 1.0, %v704
    %v706 = vrcp.pop %v620
    %v707 = vmul.f32 %v620, %v706
    %v708 = vsub.f32 1.0, %v707
    %v709 = vmul.f32 %v706, %v708
    %v710 = vadd.f32 %v706, %v709
    %vm711 = vweird.f32 %v620
    %vm712 = vweird.f32 %v706
    %vm713 = vmor %vm711, %vm712
    %v714 = vsel %vm713, %v706, %v710
    %v715 = vand.u32 2147483647, %v620
    %vm716 = vcmp.eq.f32.partialorder %v715, 8.507059e+37
    %v717 = vand.u32 %v620, 2147483648
    %v718 = vor.u32 1.1754944e-38, %v717
    %v719 = vsel %vm716, %v718, %v714
    %v720 = vmul.f32 1.0, %v719
    %v721 = vrcp.pop %v621
    %v722 = vmul.f32 %v621, %v721
    %v723 = vsub.f32 1.0, %v722
    %v724 = vmul.f32 %v721, %v723
    %v725 = vadd.f32 %v721, %v724
    %vm726 = vweird.f32 %v621
    %vm727 = vweird.f32 %v721
    %vm728 = vmor %vm726, %vm727
    %v729 = vsel %vm728, %v721, %v725
    %v730 = vand.u32 2147483647, %v621
    %vm731 = vcmp.eq.f32.partialorder %v730, 8.507059e+37
    %v732 = vand.u32 %v621, 2147483648
    %v733 = vor.u32 1.1754944e-38, %v732
    %v734 = vsel %vm731, %v733, %v729
    %v735 = vmul.f32 1.0, %v734
    %v736 = vrcp.pop %v622
    %v737 = vmul.f32 %v622, %v736
    %v738 = vsub.f32 1.0, %v737
    %v739 = vmul.f32 %v736, %v738
    %v740 = vadd.f32 %v736, %v739
    %vm741 = vweird.f32 %v622
    %vm742 = vweird.f32 %v736
    %vm743 = vmor %vm741, %vm742
    %v744 = vsel %vm743, %v736, %v740
    %v745 = vand.u32 2147483647, %v622
    %vm746 = vcmp.eq.f32.partialorder %v745, 8.507059e+37
    %v747 = vand.u32 %v622, 2147483648
    %v748 = vor.u32 1.1754944e-38, %v747
    %v749 = vsel %vm746, %v748, %v744
    %v750 = vmul.f32 1.0, %v749
    %v751 = vrcp.pop %v623
    %v752 = vmul.f32 %v623, %v751
    %v753 = vsub.f32 1.0, %v752
    %v754 = vmul.f32 %v751, %v753
    %v755 = vadd.f32 %v751, %v754
    %vm756 = vweird.f32 %v623
    %vm757 = vweird.f32 %v751
    %vm758 = vmor %vm756, %vm757
    %v759 = vsel %vm758, %v751, %v755
    %v760 = vand.u32 2147483647, %v623
    %vm761 = vcmp.eq.f32.partialorder %v760, 8.507059e+37
    %v762 = vand.u32 %v623, 2147483648
    %v763 = vor.u32 1.1754944e-38, %v762
    %v764 = vsel %vm761, %v763, %v759
    %v765 = vmul.f32 1.0, %v764
    %v766 = vrcp.pop %v624
    %v767 = vmul.f32 %v624, %v766
    %v768 = vsub.f32 1.0, %v767
    %v769 = vmul.f32 %v766, %v768
    %v770 = vadd.f32 %v766, %v769
    %vm771 = vweird.f32 %v624
    %vm772 = vweird.f32 %v766
    %vm773 = vmor %vm771, %vm772
    %v774 = vsel %vm773, %v766, %v770
    %v775 = vand.u32 2147483647, %v624
    %vm776 = vcmp.eq.f32.partialorder %v775, 8.507059e+37
    %v777 = vand.u32 %v624, 2147483648
    %v778 = vor.u32 1.1754944e-38, %v777
    %v779 = vsel %vm776, %v778, %v774
    %v780 = vmul.f32 1.0, %v779
    %v781 = vrcp.pop %v625
    %v782 = vmul.f32 %v625, %v781
    %v783 = vsub.f32 1.0, %v782
    %v784 = vmul.f32 %v781, %v783
    %v785 = vadd.f32 %v781, %v784
    %vm786 = vweird.f32 %v625
    %vm787 = vweird.f32 %v781
    %vm788 = vmor %vm786, %vm787
    %v789 = vsel %vm788, %v781, %v785
    %v790 = vand.u32 2147483647, %v625
    %vm791 = vcmp.eq.f32.partialorder %v790, 8.507059e+37
    %v792 = vand.u32 %v625, 2147483648
    %v793 = vor.u32 1.1754944e-38, %v792
    %v794 = vsel %vm791, %v793, %v789
    %v795 = vmul.f32 1.0, %v794
    %v796 = vrcp.pop %v626
    %v797 = vmul.f32 %v626, %v796
    %v798 = vsub.f32 1.0, %v797
    %v799 = vmul.f32 %v796, %v798
    %v800 = vadd.f32 %v796, %v799
    %vm801 = vweird.f32 %v626
    %vm802 = vweird.f32 %v796
    %vm803 = vmor %vm801, %vm802
    %v804 = vsel %vm803, %v796, %v800
    %v805 = vand.u32 2147483647, %v626
    %vm806 = vcmp.eq.f32.partialorder %v805, 8.507059e+37
    %v807 = vand.u32 %v626, 2147483648
    %v808 = vor.u32 1.1754944e-38, %v807
    %v809 = vsel %vm806, %v808, %v804
    %v810 = vmul.f32 1.0, %v809
    %v811 = vrcp.pop %v627
    %v812 = vmul.f32 %v627, %v811
    %v813 = vsub.f32 1.0, %v812
    %v814 = vmul.f32 %v811, %v813
    %v815 = vadd.f32 %v811, %v814
    %vm816 = vweird.f32 %v627
    %vm817 = vweird.f32 %v811
    %vm818 = vmor %vm816, %vm817
    %v819 = vsel %vm818, %v811, %v815
    %v820 = vand.u32 2147483647, %v627
    %vm821 = vcmp.eq.f32.partialorder %v820, 8.507059e+37
    %v822 = vand.u32 %v627, 2147483648
    %v823 = vor.u32 1.1754944e-38, %v822
    %v824 = vsel %vm821, %v823, %v819
    %v825 = vmul.f32 1.0, %v824
    %v826 = vrcp.pop %v628
    %v827 = vmul.f32 %v628, %v826
    %v828 = vsub.f32 1.0, %v827
    %v829 = vmul.f32 %v826, %v828
    %v830 = vadd.f32 %v826, %v829
    %vm831 = vweird.f32 %v628
    %vm832 = vweird.f32 %v826
    %vm833 = vmor %vm831, %vm832
    %v834 = vsel %vm833, %v826, %v830
    %v835 = vand.u32 2147483647, %v628
    %vm836 = vcmp.eq.f32.partialorder %v835, 8.507059e+37
    %v837 = vand.u32 %v628, 2147483648
    %v838 = vor.u32 1.1754944e-38, %v837
    %v839 = vsel %vm836, %v838, %v834
    %v840 = vmul.f32 1.0, %v839
    %v841 = vrcp.pop %v629
    %v842 = vmul.f32 %v629, %v841
    %v843 = vsub.f32 1.0, %v842
    %v844 = vmul.f32 %v841, %v843
    %v845 = vadd.f32 %v841, %v844
    %vm846 = vweird.f32 %v629
    %vm847 = vweird.f32 %v841
    %vm848 = vmor %vm846, %vm847
    %v849 = vsel %vm848, %v841, %v845
    %v850 = vand.u32 2147483647, %v629
    %vm851 = vcmp.eq.f32.partialorder %v850, 8.507059e+37
    %v852 = vand.u32 %v629, 2147483648
    %v853 = vor.u32 1.1754944e-38, %v852
    %v854 = vsel %vm851, %v853, %v849
    %v855 = vmul.f32 1.0, %v854
    %v856 = vrcp.pop %v630
    %v857 = vmul.f32 %v630, %v856
    %v858 = vsub.f32 1.0, %v857
    %v859 = vmul.f32 %v856, %v858
    %v860 = vadd.f32 %v856, %v859
    %vm861 = vweird.f32 %v630
    %vm862 = vweird.f32 %v856
    %vm863 = vmor %vm861, %vm862
    %v864 = vsel %vm863, %v856, %v860
    %v865 = vand.u32 2147483647, %v630
    %vm866 = vcmp.eq.f32.partialorder %v865, 8.507059e+37
    %v867 = vand.u32 %v630, 2147483648
    %v868 = vor.u32 1.1754944e-38, %v867
    %v869 = vsel %vm866, %v868, %v864
    %v870 = vmul.f32 1.0, %v869
    %v887 = vlaneseq
    %v888 = vand.u32 %v887, 127
    %v889 = vperm.slane %v645, %v888
    %v890 = vadd.s32 %v888, 4294967288
    %v891 = vperm.slane %v660, %v890
    %vm892 = vcmask 130112
    %v893 = vsel %vm892, %v891, %v889
    %v894 = vadd.s32 %v888, 4294967280
    %v895 = vperm.slane %v675, %v894
    %vm896 = vcmask 195712
    %v897 = vsel %vm896, %v895, %v893
    %v898 = vadd.s32 %v888, 4294967272
    %v899 = vperm.slane %v690, %v898
    %vm900 = vcmask 261312
    %v901 = vsel %vm900, %v899, %v897
    %v902 = vadd.s32 %v888, 4294967264
    %v903 = vperm.slane %v705, %v902
    %vm904 = vcmask 326912
    %v905 = vsel %vm904, %v903, %v901
    %v906 = vadd.s32 %v888, 4294967256
    %v907 = vperm.slane %v720, %v906
    %vm908 = vcmask 392512
    %v909 = vsel %vm908, %v907, %v905
    %v910 = vadd.s32 %v888, 4294967248
    %v911 = vperm.slane %v735, %v910
    %vm912 = vcmask 458112
    %v913 = vsel %vm912, %v911, %v909
    %v914 = vadd.s32 %v888, 4294967240
    %v915 = vperm.slane %v750, %v914
    %vm916 = vcmask 523712
    %v917 = vsel %vm916, %v915, %v913
    %v918 = vadd.s32 %v888, 4294967232
    %v919 = vperm.slane %v765, %v918
    %vm920 = vcmask 589312
    %v921 = vsel %vm920, %v919, %v917
    %v922 = vadd.s32 %v888, 4294967224
    %v923 = vperm.slane %v780, %v922
    %vm924 = vcmask 654912
    %v925 = vsel %vm924, %v923, %v921
    %v926 = vadd.s32 %v888, 4294967216
    %v927 = vperm.slane %v795, %v926
    %vm928 = vcmask 720512
    %v929 = vsel %vm928, %v927, %v925
    %v930 = vadd.s32 %v888, 4294967208
    %v931 = vperm.slane %v810, %v930
    %vm932 = vcmask 786112
    %v933 = vsel %vm932, %v931, %v929
    %v934 = vadd.s32 %v888, 4294967200
    %v935 = vperm.slane %v825, %v934
    %vm936 = vcmask 851712
    %v937 = vsel %vm936, %v935, %v933
    %v938 = vadd.s32 %v888, 4294967192
    %v939 = vperm.slane %v840, %v938
    %vm940 = vcmask 917312
    %v941 = vsel %vm940, %v939, %v937
    %v942 = vadd.s32 %v888, 4294967184
    %v943 = vperm.slane %v855, %v942
    %vm944 = vcmask 982912
    %v945 = vsel %vm944, %v943, %v941
    %v946 = vadd.s32 %v888, 4294967176
    %v947 = vperm.slane %v870, %v946
    %vm948 = vcmask 1048512
    %v949 = vsel %vm948, %v947, %v945
    %951 = vst [vmem:[#allocation13] sm:$0x1] %v949
    // Predicated region
    $region37: #{tpu_custom_call.1} parent=1 // pred_check
      _
    $region38: #{tpu_custom_call.1} parent=1 // pred_check_branch
      %953 = sbr.rel (0) target = $region40
    $region39: #{tpu_custom_call.1} parent=1 // pred_region
      %955 = vsyncadd [#allocation9], 0
      %s957 = sshll.u32 [#allocation13], 4
      %s958 = int_to_ptr.vmem [resolvable:$true] %s957
      %s959 = sshll.u32 %s6, 4
      %s960 = int_to_ptr.hbm [resolvable:$true] %s959
      %962 = dma.vmem_to_hbm [thread:$0]  %s958, 16, %s960, [#allocation9]
    $region40: #{tpu_custom_call.1} parent=1 // pred_fallthru
      _
    // Predicated region
    $region41: #{tpu_custom_call.1} parent=1 // pred_check
      _
    $region42: #{tpu_custom_call.1} parent=1 // pred_check_branch
      %964 = sbr.rel (0) target = $region44
    $region43: #{tpu_custom_call.1} parent=1 // pred_region
      %966 = dma.done [#allocation9], 16
    $region44: #{tpu_custom_call.1} parent=1 // pred_fallthru
      _
    %967 = vsyncpa [#allocation8], 1
    %968 = vsyncpa [#allocation11], 1
    %969 = vsyncpa [#allocation9], 1

</llo_original>
